<compile_context>
chip_gen: v6e
topology: v6e:2x2x1
jax: 0.10.0
libtpu: 0.0.40
codegen_flags: <defaults>
</compile_context>

<pallas_src>
import jax
import jax.numpy as jnp
from jax.experimental import pallas as pl
from jax.experimental.pallas import tpu as pltpu

LANE = 128     # lane width of a vreg
SUBLANE = 8    # sublane count of a vreg


def mlp_kernel(x_ref, p_ref, o_ref):
    # x_ref: (1, NP)   batch on the lane axis, NP a multiple of 128
    # p_ref: (HP, 3)   columns = [w1, b1, w2]; row H is the folded bias unit
    #                  [0, 1, b2]; rows H+1..HP-1 are all-zero.
    # o_ref: (1, NP)
    x = x_ref[...]                       # (1, NP)
    w1 = p_ref[:, 0:1]                   # (HP, 1)
    b1 = p_ref[:, 1:2]                   # (HP, 1)
    w2 = p_ref[:, 2:3]                   # (HP, 1)

    # hidden = relu(w1 * x + b1)  -> (HP, NP): pure VPU broadcast FMA (no MXU).
    h = jnp.maximum(w1 * x + b1, 0.0)

    # predict = sum_h (w2 * h)    -> (1, NP): unmasked XLU sublane reduce over
    # full (multiple-of-8) sublanes; b2 is already folded in as a hidden unit
    # and zero-padded rows contribute exactly 0.
    o_ref[...] = jnp.sum(w2 * h, axis=0, keepdims=True).astype(o_ref.dtype)


def pack_params(w1, b1, w2, b2, dtype=jnp.float32):
    """Pack torch-layout Linear params into one (HP, 3) array.

    Call ONCE at init (hoisted out of the per-forward path).
      w1: (H, 1)  hidden.weight     b1: (H,)  hidden.bias
      w2: (1, H)  predict.weight    b2: (1,)  predict.bias
    Row H folds b2 into the reduction as a fake hidden unit [w1=0, b1=1, w2=b2];
    rows H+1..HP-1 are zero so the sublane reduce needs no masking.
    """
    H = w1.shape[0]
    HP = ((H + 1 + SUBLANE - 1) // SUBLANE) * SUBLANE
    p = jnp.zeros((HP, 3), dtype=dtype)
    p = p.at[:H, 0].set(w1.reshape(H).astype(dtype))
    p = p.at[:H, 1].set(b1.reshape(H).astype(dtype))
    p = p.at[:H, 2].set(w2.reshape(H).astype(dtype))
    p = p.at[H, 1].set(jnp.asarray(1.0, dtype=dtype))
    p = p.at[H, 2].set(b2.reshape(()).astype(dtype))
    return p


def net_forward(x, packed_params):
    """Forward pass of `net` (n_features=1, n_output=1).

    x:             (N, 1) input
    packed_params: (HP, 3) from pack_params()
    returns        (N, 1)
    """
    N = x.shape[0]
    HP = packed_params.shape[0]
    dtype = x.dtype
    NP = ((N + LANE - 1) // LANE) * LANE

    # Batch on lanes, zero-padded to a 128-multiple (lane-dense, unmasked vst).
    x_t = jnp.pad(x.reshape(1, N), ((0, 0), (0, NP - N)))

    itemsize = jnp.dtype(dtype).itemsize
    cost = pl.CostEstimate(
        flops=2 * 2 * NP * HP,
        transcendentals=0,
        bytes_accessed=(NP + 3 * HP + NP) * itemsize,
    )

    vmem = pl.BlockSpec(memory_space=pltpu.MemorySpace.VMEM)
    y = pl.pallas_call(
        mlp_kernel,
        out_shape=jax.ShapeDtypeStruct((1, NP), dtype),
        in_specs=[vmem, vmem],
        out_specs=vmem,
        cost_estimate=cost,
        compiler_params=pltpu.CompilerParams(
            # Let XLA fuse the x pad/reshape (and any params cast) into the
            # custom-call operands instead of separate HLO launches.
            allow_input_fusion=[True, True],
        ),
    )(x_t, packed_params.astype(dtype))
    return y[0, :N].reshape(N, 1)


def init_linear_params(key, fan_in, fan_out, dtype=jnp.float32):
    """torch.nn.Linear default init: U(-1/sqrt(fan_in), 1/sqrt(fan_in)).
    Returns weight in torch layout (fan_out, fan_in) and bias (fan_out,)."""
    kw, kb = jax.random.split(key)
    bound = 1.0 / (fan_in ** 0.5)
    w = jax.random.uniform(kw, (fan_out, fan_in), dtype, minval=-bound, maxval=bound)
    b = jax.random.uniform(kb, (fan_out,), dtype, minval=-bound, maxval=bound)
    return w, b


if __name__ == "__main__":
    # Same setup as the reference regression script: x = linspace(-1, 1, 100)[:, None]
    n_features, n_hidden, n_output = 1, 10, 1
    N = 100

    key = jax.random.PRNGKey(0)
    k1, k2 = jax.random.split(key)
    w1, b1 = init_linear_params(k1, n_features, n_hidden)   # (10, 1), (10,)
    w2, b2 = init_linear_params(k2, n_hidden, n_output)     # (1, 10), (1,)

    # Parameter packing is done ONCE here, outside the per-forward path.
    packed = pack_params(w1, b1, w2, b2, dtype=jnp.float32)  # (16, 3)

    x = jnp.expand_dims(jnp.linspace(-1.0, 1.0, N, dtype=jnp.float32), axis=1)  # (100, 1)

    fwd = jax.jit(net_forward)
    out = jax.block_until_ready(fwd(x, packed))

    # Reference check in plain JAX (torch-layout weights).
    ref = jnp.maximum(x @ w1.T + b1, 0.0) @ w2.T + b2
    assert out.shape == (N, n_output)
    assert jnp.allclose(out, ref, atol=1e-5, rtol=1e-5)

    print("KERNEL_OK")
</pallas_src>

<mosaic_0001>
module attributes {stable_mosaic.version = 11 : i64} {
  func.func @mlp_kernel(%arg0: memref<1x128xf32, #tpu.memory_space<vmem>>, %arg1: memref<16x3xf32, #tpu.memory_space<vmem>>, %arg2: memref<1x128xf32, #tpu.memory_space<vmem>>) attributes {dimension_semantics = [], scalar_prefetch = 0 : i64, scratch_operands = 0 : i64, tpu.core_type = #tpu.core_type<tc>} {
    %c0 = arith.constant 0 : index
    %c0_0 = arith.constant 0 : index
    %0 = vector.load %arg0[%c0, %c0_0] : memref<1x128xf32, #tpu.memory_space<vmem>>, vector<1x128xf32>
    %c0_1 = arith.constant 0 : index
    %c0_2 = arith.constant 0 : index
    %1 = vector.load %arg1[%c0_1, %c0_2] : memref<16x3xf32, #tpu.memory_space<vmem>>, vector<16x1xf32>
    %c0_3 = arith.constant 0 : index
    %c1 = arith.constant 1 : index
    %2 = vector.load %arg1[%c0_3, %c1] : memref<16x3xf32, #tpu.memory_space<vmem>>, vector<16x1xf32>
    %c0_4 = arith.constant 0 : index
    %c2 = arith.constant 2 : index
    %3 = vector.load %arg1[%c0_4, %c2] : memref<16x3xf32, #tpu.memory_space<vmem>>, vector<16x1xf32>
    %4 = vector.broadcast %1 : vector<16x1xf32> to vector<16x128xf32>
    %5 = vector.broadcast %0 : vector<1x128xf32> to vector<16x128xf32>
    %6 = arith.mulf %4, %5 : vector<16x128xf32>
    %7 = vector.broadcast %2 : vector<16x1xf32> to vector<16x128xf32>
    %8 = arith.addf %6, %7 : vector<16x128xf32>
    %cst = arith.constant 0.000000e+00 : f32
    %9 = vector.broadcast %cst : f32 to vector<16x128xf32>
    %10 = arith.maximumf %8, %9 : vector<16x128xf32>
    %11 = vector.broadcast %3 : vector<16x1xf32> to vector<16x128xf32>
    %12 = arith.mulf %11, %10 : vector<16x128xf32>
    %cst_5 = arith.constant dense<0.000000e+00> : vector<128xf32>
    %13 = vector.multi_reduction <add>, %12, %cst_5 [0] : vector<16x128xf32> to vector<128xf32>
    %14 = vector.shape_cast %13 : vector<128xf32> to vector<1x128xf32>
    %c0_6 = arith.constant 0 : index
    %c0_7 = arith.constant 0 : index
    %15 = vector.load %arg2[%c0_6, %c0_7] : memref<1x128xf32, #tpu.memory_space<vmem>>, vector<1x128xf32>
    tpu.vector_store %arg2[%c0_6, %c0_7], %14 {strides = array<i32>} : memref<1x128xf32, #tpu.memory_space<vmem>>, vector<1x128xf32>,
    return
  }
}

</mosaic_0001>

<llo_original>
// kernel: net_forward.2
$region0: #{net_forward.2}
  #allocation0 [shape = 'u32[]', space=smem, size = 0x4, offset = 0x4, fixed_abs, tag = 'smem constant byte address 0x4 - core index']
  #allocation1 [shape = 'u32[144,128]{1,0:T(1,128)}', space=vmem, size = 0x12000, scoped, tag = 'internal scratch']
  #allocation2 [shape = 'u32[2048]{0}', space=vmem, size = 0x2000, scoped, tag = 'scoped memory for net_forward.2']
  #allocation3 [shape = 'u32[2048]{0}', space=vmem, size = 0x2000, scoped, tag = 'scoped memory for net_forward.2']
  #allocation4 [shape = 'u32[2048]{0}', space=vmem, size = 0x2000, scoped, tag = 'scoped memory for net_forward.2']
  #allocation5 [shape = 'u32[2048]{0}', space=vmem, size = 0x2000, scoped, tag = 'scoped memory for net_forward.2']
  #allocation6 [shape = 'u32[2048]{0}', space=vmem, size = 0x2000, scoped, tag = 'scoped memory for net_forward.2']
  %s0 = inlined_call_operand.vmem [shape: f32[16,3], index: 0, kind: input, shape index: {}]
  %s1 = inlined_call_operand.vmem [shape: f32[1,100], index: 1, kind: input, shape index: {}]
  %s2 = inlined_call_operand.<no memory space> [shape: f32[], index: 2, kind: input, shape index: {}]
  %s3 = inlined_call_operand.vmem [shape: f32[1,128], index: 3, kind: output, shape index: {}]
  %s4 = sld [smem:[#allocation0]]
  $region18: #{net_forward.2} parent=0
    _
  %s6 = ssub.s32 1, %s4
  %s7 = scalar_select 0, %s6, %s4
  %v8 = vstv %s2
  $region1: #{net_forward.2} parent=0
    #allocation7 [shape = 'u8[512]{0}', space=vmem, size = 0x400, dematerialized = true, scoped, tag = 'FusionAdapter Buffer %fusion.1 = f32[1,128]{1,0:T(1,128)} fusion(%param_1.1, %param_2), kind=kLoop, calls=%fused_computation.1.clone, metadata={op_name="jit(net_forward)/jit(_pad)/pad" stack_frame_id=8}']
    // Predicated region
    $region2: #{net_forward.2} parent=1 // pred_check
      _
    $region3: #{net_forward.2} parent=1 // pred_check_branch
      %10 = sbr.rel (0) target = $region5
    $region4: #{net_forward.2} parent=1 // pred_region
      _
    $region5: #{net_forward.2} parent=1 // pred_fallthru
      _
    // Predicated region
    $region6: #{net_forward.2} parent=1 // pred_check
      _
    $region7: #{net_forward.2} parent=1 // pred_check_branch
      %12 = sbr.rel (0) target = $region9
    $region8: #{net_forward.2} parent=1 // pred_region
      _
    $region9: #{net_forward.2} parent=1 // pred_fallthru
      _
    %v13 = vld [vmem:[%s1] sm:$0x1]
    %v14 = vlaneseq
    %v15 = vshrl.u32 %v14, 7
    %vm17 = vcmp.lt.s32.totalorder %v15, 1
    %v18 = vsel %vm17, %v13, %v8
    %v19 = vlaneseq
    %v20 = vand.u32 %v19, 127
    %vm22 = vcmp.lt.s32.totalorder %v20, 100
    %v23 = vsel %vm22, %v18, %v8
    %s25 = ssub.s32 2, 1
    %26 = vst [vmem:[#allocation7] sm:%s25] %v23
    %v27 = vld [vmem:[#allocation7] sm:$0x1]
    %v28 = vld [vmem:[%s0] sm:$0xff]
    %v29 = vld [vmem:[%s0 + $0x8] sm:$0xff]
    %31 = vset.pattern.permute.xlu0 0
    %32 = vperm.xlu0 %31, %v28
    %v33 = vpop.permute.xlu0 %32
    %36 = vset.pattern.permute.xlu0 0
    %37 = vperm.xlu0 %36, %v29
    %v38 = vpop.permute.xlu0 %37
    %v41 = vlaneseq
    %v42 = vshrl.u32 %v41, 7
    %v43 = vsub.s32 0, %v42
    %v44 = vrot.slane %v27, %v43
    %v46 = vmul.f32 %v33, %v44
    %v47 = vmul.f32 %v38, %v44
    %48 = vset.pattern.permute.xlu0 1
    %49 = vperm.xlu0 %48, %v28
    %v50 = vpop.permute.xlu0 %49
    %52 = vset.pattern.permute.xlu0 1
    %53 = vperm.xlu0 %52, %v29
    %v54 = vpop.permute.xlu0 %53
    %v56 = vadd.f32 %v46, %v50
    %v57 = vadd.f32 %v47, %v54
    %v58 = vmax.f32 %v56, 0.0
    %v59 = vmax.f32 %v57, 0.0
    %60 = vset.pattern.permute.xlu0 2
    %61 = vperm.xlu0 %60, %v28
    %v62 = vpop.permute.xlu0 %61
    %64 = vset.pattern.permute.xlu0 2
    %65 = vperm.xlu0 %64, %v29
    %v66 = vpop.permute.xlu0 %65
    %v68 = vmul.f32 %v62, %v58
    %v69 = vmul.f32 %v66, %v59
    %v70 = vadd.f32 %v68, %v69
    %v71 = vrot.slane %v70, 4
    %v72 = vadd.f32 %v70, %v71
    %v73 = vrot.slane %v72, 2
    %v74 = vadd.f32 %v72, %v73
    %v75 = vrot.slane %v74, 1
    %v76 = vadd.f32 %v74, %v75
    %77 = vst [vmem:[%s3] sm:$0x1] %v76
    // Predicated region
    $region10: #{net_forward.2} parent=1 // pred_check
      _
    $region11: #{net_forward.2} parent=1 // pred_check_branch
      %79 = sbr.rel (0) target = $region13
    $region12: #{net_forward.2} parent=1 // pred_region
      _
    $region13: #{net_forward.2} parent=1 // pred_fallthru
      _
    // Predicated region
    $region14: #{net_forward.2} parent=1 // pred_check
      _
    $region15: #{net_forward.2} parent=1 // pred_check_branch
      %81 = sbr.rel (0) target = $region17
    $region16: #{net_forward.2} parent=1 // pred_region
      _
    $region17: #{net_forward.2} parent=1 // pred_fallthru
      _

</llo_original>
